<compile_context>
chip_gen: v5e
topology: v5e:2x2
jax: 0.10.0
libtpu: 0.0.40
codegen_flags: <defaults>
</compile_context>

<pallas_src>
import functools

import jax
import jax.numpy as jnp
from jax.experimental import pallas as pl
from jax.experimental.pallas import tpu as pltpu

LANE = 128  # TPU lane width


def _round_up(x, m):
    return (x + m - 1) // m * m


def cbow_kernel(x_ref, w1_ref, b1_ref, w2_ref, b2_ref, out_ref, *, v_actual):
    # x_ref : (TB, Fp)  bf16   -- streamed per grid step
    # w1_ref: (Fp, H)   bf16   -- resident (constant index_map)
    # b1_ref: (1, H)    f32    -- resident
    # w2_ref: (H, Vp)   bf16   -- resident
    # b2_ref: (1, Vp)   f32    -- resident
    # out_ref:(TB, Vp)  f32    -- log-probs (padded lanes = -inf, sliced off by wrapper)
    x = x_ref[...]

    # linear1 + ReLU  (MXU matmul, f32 accumulate; bias/ReLU on VPU in f32)
    h = jnp.dot(x, w1_ref[...], preferred_element_type=jnp.float32) + b1_ref[...]
    h = jnp.maximum(h, 0.0)

    # linear2 (MXU, bf16 inputs, f32 accumulate)
    logits = jnp.dot(h.astype(w2_ref.dtype), w2_ref[...],
                     preferred_element_type=jnp.float32) + b2_ref[...]

    # Mask padded vocab lanes to -inf so they do not perturb max / sum-exp.
    vp = logits.shape[-1]
    if vp != v_actual:
        lane_id = jax.lax.broadcasted_iota(jnp.int32, logits.shape, 1)
        logits = jnp.where(lane_id < v_actual, logits, -jnp.inf)

    # Numerically stable log_softmax over the vocab (lane) axis.
    # max/sum -> XLU, exp/log -> EUP: hidden behind the MXU work at large batch.
    m = jnp.max(logits, axis=-1, keepdims=True)
    shifted = logits - m
    lse = jnp.log(jnp.sum(jnp.exp(shifted), axis=-1, keepdims=True))
    out_ref[...] = shifted - lse


def cbow_forward(inputs, emb_table, w1, b1, w2, b2, context_size, embedding_dim,
                 *, tb=128):
    """inputs: (B, 2*context_size) int32; returns (B, vocab) f32 log-probs.

    Weights are stored transposed vs. PyTorch: w1:(F,128), w2:(128,V), so the
    kernel computes y = x @ W + b directly.
    """
    B = inputs.shape[0]
    F = 2 * context_size * embedding_dim
    H = w1.shape[1]
    V = w2.shape[1]

    Fp = _round_up(F, LANE)          # lane-dense K for the first matmul
    Vp = _round_up(V, LANE)          # lane-dense N / output
    Bp = _round_up(max(B, tb), tb)   # batch padded to a whole number of tiles

    # Embedding lookup + flatten (index glue, stays in JAX), cast to bf16 so the
    # activation round-trip through HBM is half the bytes.
    x = jnp.take(emb_table, inputs, axis=0).reshape(B, F).astype(jnp.bfloat16)
    x = jnp.pad(x, ((0, Bp - B), (0, Fp - F)))

    # bf16 weights for the MXU; zero-pad the padded F rows / V cols.
    w1p = jnp.pad(w1.astype(jnp.bfloat16), ((0, Fp - F), (0, 0)))
    w2p = jnp.pad(w2.astype(jnp.bfloat16), ((0, 0), (0, Vp - V)))
    b1_2d = b1.reshape(1, H).astype(jnp.float32)
    b2_2d = jnp.pad(b2.reshape(1, V).astype(jnp.float32), ((0, 0), (0, Vp - V)))

    grid = (Bp // tb,)
    kernel = functools.partial(cbow_kernel, v_actual=V)

    flops = 2 * Bp * (Fp * H + H * Vp)
    transcendentals = Bp * Vp + Bp                      # exp per logit + log per row
    bytes_accessed = (x.size * 2 + w1p.size * 2 + w2p.size * 2
                      + b1_2d.size * 4 + b2_2d.size * 4 + Bp * Vp * 4)

    out = pl.pallas_call(
        kernel,
        out_shape=jax.ShapeDtypeStruct((Bp, Vp), jnp.float32),
        grid_spec=pltpu.PrefetchScalarGridSpec(
            num_scalar_prefetch=0,
            grid=grid,
            in_specs=[
                pl.BlockSpec((tb, Fp), lambda i: (i, 0)),   # x    : streams with batch
                pl.BlockSpec((Fp, H), lambda i: (0, 0)),    # w1   : resident
                pl.BlockSpec((1, H), lambda i: (0, 0)),     # b1   : resident
                pl.BlockSpec((H, Vp), lambda i: (0, 0)),    # w2   : resident
                pl.BlockSpec((1, Vp), lambda i: (0, 0)),    # b2   : resident
            ],
            out_specs=pl.BlockSpec((tb, Vp), lambda i: (i, 0)),
        ),
        compiler_params=pltpu.CompilerParams(
            dimension_semantics=("parallel",)),
        cost_estimate=pl.CostEstimate(
            flops=flops,
            transcendentals=transcendentals,
            bytes_accessed=bytes_accessed),
    )(x, w1p, b1_2d, w2p, b2_2d)

    return out[:B, :V]


def reference_forward(inputs, emb_table, w1, b1, w2, b2, context_size, embedding_dim):
    B = inputs.shape[0]
    F = 2 * context_size * embedding_dim
    x = jnp.take(emb_table, inputs, axis=0).reshape(B, F).astype(jnp.float32)
    h = jnp.maximum(x @ w1 + b1, 0.0)
    logits = h @ w2 + b2
    return jax.nn.log_softmax(logits, axis=1)


if __name__ == "__main__":
    # Small, deterministic problem sizes consistent with the module.
    vocab_size = 64
    context_size = 2
    embedding_dim = 16
    hidden = 128
    batch = 8
    F = 2 * context_size * embedding_dim

    key = jax.random.PRNGKey(0)
    k_emb, k_w1, k_b1, k_w2, k_b2, k_in = jax.random.split(key, 6)

    emb_table = jax.random.normal(k_emb, (vocab_size, embedding_dim), jnp.float32) * 0.1
    w1 = jax.random.normal(k_w1, (F, hidden), jnp.float32) * 0.05
    b1 = jax.random.normal(k_b1, (hidden,), jnp.float32) * 0.01
    w2 = jax.random.normal(k_w2, (hidden, vocab_size), jnp.float32) * 0.05
    b2 = jax.random.normal(k_b2, (vocab_size,), jnp.float32) * 0.01

    inputs = jax.random.randint(k_in, (batch, 2 * context_size), 0, vocab_size,
                                dtype=jnp.int32)

    log_probs = cbow_forward(inputs, emb_table, w1, b1, w2, b2,
                             context_size, embedding_dim)
    log_probs = jax.block_until_ready(log_probs)

    ref = reference_forward(inputs, emb_table, w1, b1, w2, b2,
                            context_size, embedding_dim)

    assert log_probs.shape == (batch, vocab_size)
    assert bool(jnp.all(jnp.isfinite(log_probs)))
    # bf16 matmul inputs (f32 accumulate) -> compare with a modest tolerance
    # against the f32 reference.
    assert jnp.allclose(log_probs, ref, atol=2e-2, rtol=2e-2)
    # Log-probs of each row must (approximately) exponentiate-sum to 1.
    assert jnp.allclose(jnp.sum(jnp.exp(log_probs), axis=1), 1.0, atol=1e-3)

    print("KERNEL_OK")
</pallas_src>

<mosaic_0001>
module attributes {stable_mosaic.version = 11 : i64} {
  func.func @cbow_kernel(%arg0: i32, %arg1: memref<128x128xbf16, #tpu.memory_space<vmem>>, %arg2: memref<128x128xbf16, #tpu.memory_space<vmem>>, %arg3: memref<1x128xf32, #tpu.memory_space<vmem>>, %arg4: memref<128x128xbf16, #tpu.memory_space<vmem>>, %arg5: memref<1x128xf32, #tpu.memory_space<vmem>>, %arg6: memref<128x128xf32, #tpu.memory_space<vmem>>) attributes {dimension_semantics = [#tpu.dimension_semantics<parallel>], iteration_bounds = array<i64: 1>, scalar_prefetch = 0 : i64, scratch_operands = 0 : i64, tpu.core_type = #tpu.core_type<tc>, window_params = [{transform_indices = @transform_0, window_bounds = array<i64: 128, 128>}, {pipeline_mode = #tpu.pipeline_mode<synchronous>, transform_indices = @transform_1, window_bounds = array<i64: 128, 128>}, {pipeline_mode = #tpu.pipeline_mode<synchronous>, transform_indices = @transform_2, window_bounds = array<i64: 1, 128>}, {pipeline_mode = #tpu.pipeline_mode<synchronous>, transform_indices = @transform_3, window_bounds = array<i64: 128, 128>}, {pipeline_mode = #tpu.pipeline_mode<synchronous>, transform_indices = @transform_4, window_bounds = array<i64: 1, 128>}, {transform_indices = @transform_5, window_bounds = array<i64: 128, 128>}]} {
    %c0 = arith.constant 0 : index
    %c0_0 = arith.constant 0 : index
    %0 = vector.load %arg1[%c0, %c0_0] : memref<128x128xbf16, #tpu.memory_space<vmem>>, vector<128x128xbf16>
    %c0_1 = arith.constant 0 : index
    %c0_2 = arith.constant 0 : index
    %1 = vector.load %arg2[%c0_1, %c0_2] : memref<128x128xbf16, #tpu.memory_space<vmem>>, vector<128x128xbf16>
    %cst = arith.constant dense<0.000000e+00> : vector<128x128xf32>
    %2 = tpu.matmul %0, %1, %cst {dimension_numbers = #tpu.dot_dimension_numbers<[1], [0], [0], [1], [0, 0, 1, 1], [], []>} : vector<128x128xbf16>, vector<128x128xbf16>, vector<128x128xf32> -> vector<128x128xf32>
    %c0_3 = arith.constant 0 : index
    %c0_4 = arith.constant 0 : index
    %3 = vector.load %arg3[%c0_3, %c0_4] : memref<1x128xf32, #tpu.memory_space<vmem>>, vector<1x128xf32>
    %4 = vector.broadcast %3 : vector<1x128xf32> to vector<128x128xf32>
    %5 = arith.addf %2, %4 : vector<128x128xf32>
    %cst_5 = arith.constant 0.000000e+00 : f32
    %6 = vector.broadcast %cst_5 : f32 to vector<128x128xf32>
    %7 = arith.maximumf %5, %6 : vector<128x128xf32>
    %8 = arith.truncf %7 : vector<128x128xf32> to vector<128x128xbf16>
    %c0_6 = arith.constant 0 : index
    %c0_7 = arith.constant 0 : index
    %9 = vector.load %arg4[%c0_6, %c0_7] : memref<128x128xbf16, #tpu.memory_space<vmem>>, vector<128x128xbf16>
    %cst_8 = arith.constant dense<0.000000e+00> : vector<128x128xf32>
    %10 = tpu.matmul %8, %9, %cst_8 {dimension_numbers = #tpu.dot_dimension_numbers<[1], [0], [0], [1], [0, 0, 1, 1], [], []>} : vector<128x128xbf16>, vector<128x128xbf16>, vector<128x128xf32> -> vector<128x128xf32>
    %c0_9 = arith.constant 0 : index
    %c0_10 = arith.constant 0 : index
    %11 = vector.load %arg5[%c0_9, %c0_10] : memref<1x128xf32, #tpu.memory_space<vmem>>, vector<1x128xf32>
    %12 = vector.broadcast %11 : vector<1x128xf32> to vector<128x128xf32>
    %13 = arith.addf %10, %12 : vector<128x128xf32>
    %14 = tpu.iota {dimensions = array<i32: 1>} : vector<128x128xi32>
    %c64_i32 = arith.constant 64 : i32
    %15 = vector.broadcast %c64_i32 : i32 to vector<128x128xi32>
    %16 = arith.cmpi slt, %14, %15 : vector<128x128xi32>
    %cst_11 = arith.constant 0xFF800000 : f32
    %17 = vector.broadcast %cst_11 : f32 to vector<128x128xf32>
    %18 = arith.select %16, %13, %17 : vector<128x128xi1>, vector<128x128xf32>
    %cst_12 = arith.constant dense<0xFF800000> : vector<128xf32>
    %19 = vector.multi_reduction <maximumf>, %18, %cst_12 [1] : vector<128x128xf32> to vector<128xf32>
    %20 = vector.shape_cast %19 : vector<128xf32> to vector<128x1xf32>
    %21 = vector.broadcast %20 : vector<128x1xf32> to vector<128x128xf32>
    %22 = arith.subf %18, %21 : vector<128x128xf32>
    %23 = math.exp %22 : vector<128x128xf32>
    %cst_13 = arith.constant dense<0.000000e+00> : vector<128xf32>
    %24 = vector.multi_reduction <add>, %23, %cst_13 [1] : vector<128x128xf32> to vector<128xf32>
    %25 = vector.shape_cast %24 : vector<128xf32> to vector<128x1xf32>
    %26 = math.log %25 : vector<128x1xf32>
    %27 = vector.broadcast %26 : vector<128x1xf32> to vector<128x128xf32>
    %28 = arith.subf %22, %27 : vector<128x128xf32>
    %c0_14 = arith.constant 0 : index
    %c0_15 = arith.constant 0 : index
    %29 = vector.load %arg6[%c0_14, %c0_15] : memref<128x128xf32, #tpu.memory_space<vmem>>, vector<128x128xf32>
    tpu.vector_store %arg6[%c0_14, %c0_15], %28 {strides = array<i32>} : memref<128x128xf32, #tpu.memory_space<vmem>>, vector<128x128xf32>,
    return
  }
  func.func @transform_0(%arg0: i32) -> (i32, i32) {
    %c0_i32 = arith.constant 0 : i32
    %c0_i32_0 = arith.constant 0 : i32
    return %arg0, %c0_i32 : i32, i32
  }
  func.func @transform_1(%arg0: i32) -> (i32, i32) {
    %c0_i32 = arith.constant 0 : i32
    %c0_i32_0 = arith.constant 0 : i32
    %c0_i32_1 = arith.constant 0 : i32
    return %c0_i32, %c0_i32_0 : i32, i32
  }
  func.func @transform_2(%arg0: i32) -> (i32, i32) {
    %c0_i32 = arith.constant 0 : i32
    %c0_i32_0 = arith.constant 0 : i32
    %c0_i32_1 = arith.constant 0 : i32
    return %c0_i32, %c0_i32_0 : i32, i32
  }
  func.func @transform_3(%arg0: i32) -> (i32, i32) {
    %c0_i32 = arith.constant 0 : i32
    %c0_i32_0 = arith.constant 0 : i32
    %c0_i32_1 = arith.constant 0 : i32
    return %c0_i32, %c0_i32_0 : i32, i32
  }
  func.func @transform_4(%arg0: i32) -> (i32, i32) {
    %c0_i32 = arith.constant 0 : i32
    %c0_i32_0 = arith.constant 0 : i32
    %c0_i32_1 = arith.constant 0 : i32
    return %c0_i32, %c0_i32_0 : i32, i32
  }
  func.func @transform_5(%arg0: i32) -> (i32, i32) {
    %c0_i32 = arith.constant 0 : i32
    %c0_i32_0 = arith.constant 0 : i32
    return %arg0, %c0_i32 : i32, i32
  }
}

</mosaic_0001>

<llo_original>
// kernel: tpu_custom_call.1
$region0: #{tpu_custom_call.1}
  #allocation0 [shape = 'u32[]', space=smem, size = 0x4, offset = 0x4, fixed_abs, tag = 'smem constant byte address 0x4 - core index']
  #allocation1 [shape = 'u32[72,128]{1,0:T(1,128)}', space=vmem, size = 0x9000, scoped, tag = 'internal scratch']
  %s0 = inlined_call_operand.hbm [shape: bf16[128,128], index: 0, kind: input, shape index: {}]
  %s1 = inlined_call_operand.hbm [shape: bf16[128,128], index: 1, kind: input, shape index: {}]
  %s2 = inlined_call_operand.vmem [shape: f32[1,128], index: 2, kind: input, shape index: {}]
  %s3 = inlined_call_operand.hbm [shape: bf16[128,128], index: 3, kind: input, shape index: {}]
  %s4 = inlined_call_operand.vmem [shape: f32[1,128], index: 4, kind: input, shape index: {}]
  %s5 = inlined_call_operand.hbm [shape: f32[128,128], index: 5, kind: output, shape index: {}]
  %s6 = sld [smem:[#allocation0]]
  $region42: #{tpu_custom_call.1} parent=0
    _
  %s8 = ssub.s32 1, %s6
  %s9 = scalar_select 0, %s8, %s6
  $region1: #{tpu_custom_call.1} parent=0
    #allocation2 [shape = 'u8[32768]{0}', space=vmem, size = 0x8000, scoped, tag = 'input window, operand 0, single buffered']
    #allocation3 [shape = 's32[1]{0}', space=sflag, size = 0x4, scoped, tag = 'scoped memory for tpu_custom_call.1']
    #allocation4 [shape = 's32[1]{0}', space=sflag, size = 0x4, scoped, tag = 'scoped memory for tpu_custom_call.1']
    #allocation5 [shape = 'u8[32768]{0}', space=vmem, size = 0x8000, scoped, tag = 'input window, operand 1, single buffered']
    #allocation6 [shape = 's32[1]{0}', space=sflag, size = 0x4, scoped, tag = 'scoped memory for tpu_custom_call.1']
    #allocation7 [shape = 'u8[32768]{0}', space=vmem, size = 0x8000, scoped, tag = 'input window, operand 3, single buffered']
    #allocation8 [shape = 'u8[65536]{0}', space=vmem, size = 0x10000, scoped, tag = 'output window, operand 0, single buffered']
    %10 = vsyncpa [#allocation3], 0
    %11 = vsyncpa [#allocation6], 0
    %12 = vsyncpa [#allocation4], 0
    // Predicated region
    $region2: #{tpu_custom_call.1} parent=1 // pred_check
      _
    $region3: #{tpu_custom_call.1} parent=1 // pred_check_branch
      %14 = sbr.rel (0) target = $region5
    $region4: #{tpu_custom_call.1} parent=1 // pred_region
      %16 = vsyncadd [#allocation3], 0
      %s17 = sshll.u32 %s0, 4
      %s18 = int_to_ptr.hbm [resolvable:$true] %s17
      %s19 = sshll.u32 [#allocation2], 4
      %s20 = int_to_ptr.vmem [resolvable:$true] %s19
      %25 = dma.hbm_to_vmem [thread:$0]  %s18, 1024, %s20, [#allocation3], 64, 64, 4
    $region5: #{tpu_custom_call.1} parent=1 // pred_fallthru
      _
    // Predicated region
    $region6: #{tpu_custom_call.1} parent=1 // pred_check
      _
    $region7: #{tpu_custom_call.1} parent=1 // pred_check_branch
      %27 = sbr.rel (0) target = $region9
    $region8: #{tpu_custom_call.1} parent=1 // pred_region
      %29 = vsyncadd [#allocation6], 0
      %s30 = sshll.u32 %s1, 4
      %s31 = int_to_ptr.hbm [resolvable:$true] %s30
      %s32 = sshll.u32 [#allocation5], 4
      %s33 = int_to_ptr.vmem [resolvable:$true] %s32
      %38 = dma.hbm_to_vmem [thread:$0]  %s31, 1024, %s33, [#allocation6], 64, 64, 4
    $region9: #{tpu_custom_call.1} parent=1 // pred_fallthru
      _
    // Predicated region
    $region10: #{tpu_custom_call.1} parent=1 // pred_check
      _
    $region11: #{tpu_custom_call.1} parent=1 // pred_check_branch
      %40 = sbr.rel (0) target = $region13
    $region12: #{tpu_custom_call.1} parent=1 // pred_region
      _
    $region13: #{tpu_custom_call.1} parent=1 // pred_fallthru
      _
    // Predicated region
    $region14: #{tpu_custom_call.1} parent=1 // pred_check
      _
    $region15: #{tpu_custom_call.1} parent=1 // pred_check_branch
      %42 = sbr.rel (0) target = $region17
    $region16: #{tpu_custom_call.1} parent=1 // pred_region
      %44 = vsyncadd [#allocation6], 0
      %s45 = sshll.u32 %s3, 4
      %s46 = int_to_ptr.hbm [resolvable:$true] %s45
      %s47 = sshll.u32 [#allocation7], 4
      %s48 = int_to_ptr.vmem [resolvable:$true] %s47
      %53 = dma.hbm_to_vmem [thread:$0]  %s46, 1024, %s48, [#allocation6], 64, 64, 4
    $region17: #{tpu_custom_call.1} parent=1 // pred_fallthru
      _
    // Predicated region
    $region18: #{tpu_custom_call.1} parent=1 // pred_check
      _
    $region19: #{tpu_custom_call.1} parent=1 // pred_check_branch
      %55 = sbr.rel (0) target = $region21
    $region20: #{tpu_custom_call.1} parent=1 // pred_region
      _
    $region21: #{tpu_custom_call.1} parent=1 // pred_fallthru
      _
    // Predicated region
    $region22: #{tpu_custom_call.1} parent=1 // pred_check
      _
    $region23: #{tpu_custom_call.1} parent=1 // pred_check_branch
      %57 = sbr.rel (0) target = $region25
    $region24: #{tpu_custom_call.1} parent=1 // pred_region
      %59 = dma.done [#allocation3], 1024
    $region25: #{tpu_custom_call.1} parent=1 // pred_fallthru
      _
    // Predicated region
    $region26: #{tpu_custom_call.1} parent=1 // pred_check
      _
    $region27: #{tpu_custom_call.1} parent=1 // pred_check_branch
      %61 = sbr.rel (0) target = $region29
    $region28: #{tpu_custom_call.1} parent=1 // pred_region
      %63 = dma.done [#allocation6], 1024
    $region29: #{tpu_custom_call.1} parent=1 // pred_fallthru
      _
    // Predicated region
    $region30: #{tpu_custom_call.1} parent=1 // pred_check
      _
    $region31: #{tpu_custom_call.1} parent=1 // pred_check_branch
      %65 = sbr.rel (0) target = $region33
    $region32: #{tpu_custom_call.1} parent=1 // pred_region
      %67 = dma.done [#allocation6], 1024
    $region33: #{tpu_custom_call.1} parent=1 // pred_fallthru
      _
    %v68 = vld [vmem:[#allocation2] sm:$0xf]
    %v69 = vld [vmem:[#allocation2 + $0x4] sm:$0xf]
    %v70 = vld [vmem:[#allocation2 + $0x8] sm:$0xf]
    %v71 = vld [vmem:[#allocation2 + $0xc] sm:$0xf]
    %v72 = vld [vmem:[#allocation2 + $0x10] sm:$0xf]
    %v73 = vld [vmem:[#allocation2 + $0x14] sm:$0xf]
    %v74 = vld [vmem:[#allocation2 + $0x18] sm:$0xf]
    %v75 = vld [vmem:[#allocation2 + $0x1c] sm:$0xf]
    %v76 = vld [vmem:[#allocation2 + $0x20] sm:$0xf]
    %v77 = vld [vmem:[#allocation2 + $0x24] sm:$0xf]
    %v78 = vld [vmem:[#allocation2 + $0x28] sm:$0xf]
    %v79 = vld [vmem:[#allocation2 + $0x2c] sm:$0xf]
    %v80 = vld [vmem:[#allocation2 + $0x30] sm:$0xf]
    %v81 = vld [vmem:[#allocation2 + $0x34] sm:$0xf]
    %v82 = vld [vmem:[#allocation2 + $0x38] sm:$0xf]
    %v83 = vld [vmem:[#allocation2 + $0x3c] sm:$0xf]
    %v84 = vld [vmem:[#allocation5] sm:$0xf]
    %v85 = vld [vmem:[#allocation5 + $0x4] sm:$0xf]
    %v86 = vld [vmem:[#allocation5 + $0x8] sm:$0xf]
    %v87 = vld [vmem:[#allocation5 + $0xc] sm:$0xf]
    %v88 = vld [vmem:[#allocation5 + $0x10] sm:$0xf]
    %v89 = vld [vmem:[#allocation5 + $0x14] sm:$0xf]
    %v90 = vld [vmem:[#allocation5 + $0x18] sm:$0xf]
    %v91 = vld [vmem:[#allocation5 + $0x1c] sm:$0xf]
    %v92 = vld [vmem:[#allocation5 + $0x20] sm:$0xf]
    %v93 = vld [vmem:[#allocation5 + $0x24] sm:$0xf]
    %v94 = vld [vmem:[#allocation5 + $0x28] sm:$0xf]
    %v95 = vld [vmem:[#allocation5 + $0x2c] sm:$0xf]
    %v96 = vld [vmem:[#allocation5 + $0x30] sm:$0xf]
    %v97 = vld [vmem:[#allocation5 + $0x34] sm:$0xf]
    %v98 = vld [vmem:[#allocation5 + $0x38] sm:$0xf]
    %v99 = vld [vmem:[#allocation5 + $0x3c] sm:$0xf]
    %v100 = vld [vmem:[%s2] sm:$0x1]
    %v102 = vperm.slane %v100, 0
    %v120 = vunpack.c.l.b16 %v68
    %v121 = vunpack.c.l.b16 %v69
    %v122 = vunpack.c.l.b16 %v70
    %v123 = vunpack.c.l.b16 %v71
    %v124 = vunpack.c.l.b16 %v72
    %v125 = vunpack.c.l.b16 %v73
    %v126 = vunpack.c.l.b16 %v74
    %v127 = vunpack.c.l.b16 %v75
    %v128 = vunpack.c.l.b16 %v76
    %v129 = vunpack.c.l.b16 %v77
    %v130 = vunpack.c.l.b16 %v78
    %v131 = vunpack.c.l.b16 %v79
    %v132 = vunpack.c.l.b16 %v80
    %v133 = vunpack.c.l.b16 %v81
    %v134 = vunpack.c.l.b16 %v82
    %v135 = vunpack.c.l.b16 %v83
    %v136 = vpack.c.b16 %v121, %v120
    %v137 = vpack.c.b16 %v123, %v122
    %v138 = vpack.c.b16 %v125, %v124
    %v139 = vpack.c.b16 %v127, %v126
    %v140 = vpack.c.b16 %v129, %v128
    %v141 = vpack.c.b16 %v131, %v130
    %v142 = vpack.c.b16 %v133, %v132
    %v143 = vpack.c.b16 %v135, %v134
    %v168 = vunpack.c.l.b16 %v84
    %v169 = vunpack.c.l.b16 %v85
    %v170 = vunpack.c.l.b16 %v86
    %v171 = vunpack.c.l.b16 %v87
    %v172 = vunpack.c.l.b16 %v88
    %v173 = vunpack.c.l.b16 %v89
    %v174 = vunpack.c.l.b16 %v90
    %v175 = vunpack.c.l.b16 %v91
    %v176 = vunpack.c.l.b16 %v92
    %v177 = vunpack.c.l.b16 %v93
    %v178 = vunpack.c.l.b16 %v94
    %v179 = vunpack.c.l.b16 %v95
    %v180 = vunpack.c.l.b16 %v96
    %v181 = vunpack.c.l.b16 %v97
    %v182 = vunpack.c.l.b16 %v98
    %v183 = vunpack.c.l.b16 %v99
    %v184 = vpack.c.b16 %v169, %v168
    %v185 = vpack.c.b16 %v171, %v170
    %v186 = vpack.c.b16 %v173, %v172
    %v187 = vpack.c.b16 %v175, %v174
    %v188 = vpack.c.b16 %v177, %v176
    %v189 = vpack.c.b16 %v179, %v178
    %v190 = vpack.c.b16 %v181, %v180
    %v191 = vpack.c.b16 %v183, %v182
    %200 = vmatpush.bf16.msra.mxu0 %v191
    %201 = vmatpush.bf16.msra.mxu0 %v190
    %202 = vmatpush.bf16.msra.mxu0 %v189
    %203 = vmatpush.bf16.msra.mxu0 %v188
    %204 = vmatpush.bf16.msra.mxu0 %v187
    %205 = vmatpush.bf16.msra.mxu0 %v186
    %206 = vmatpush.bf16.msra.mxu0 %v185
    %207 = vmatpush.bf16.msra.mxu0 %v184
    %208 = vmatmul.bf16.gmra.mxu0 %v136
    %v209 = vpop.f32.mrf.mxu0
    %v210 = vadd.f32 %v102, %v209
    %v211 = vpop.f32.mrf.mxu0
    %v212 = vadd.f32 %v102, %v211
    %213 = vmatmul.bf16.gmra.mxu0 %v137
    %v214 = vpop.f32.mrf.mxu0
    %v215 = vadd.f32 %v102, %v214
    %v216 = vpop.f32.mrf.mxu0
    %v217 = vadd.f32 %v102, %v216
    %218 = vmatmul.bf16.gmra.mxu0 %v138
    %v219 = vpop.f32.mrf.mxu0
    %v220 = vadd.f32 %v102, %v219
    %v221 = vpop.f32.mrf.mxu0
    %v222 = vadd.f32 %v102, %v221
    %223 = vmatmul.bf16.gmra.mxu0 %v139
    %v224 = vpop.f32.mrf.mxu0
    %v225 = vadd.f32 %v102, %v224
    %v226 = vpop.f32.mrf.mxu0
    %v227 = vadd.f32 %v102, %v226
    %228 = vmatmul.bf16.gmra.mxu0 %v140
    %v229 = vpop.f32.mrf.mxu0
    %v230 = vadd.f32 %v102, %v229
    %v231 = vpop.f32.mrf.mxu0
    %v232 = vadd.f32 %v102, %v231
    %233 = vmatmul.bf16.gmra.mxu0 %v141
    %v234 = vpop.f32.mrf.mxu0
    %v235 = vadd.f32 %v102, %v234
    %v236 = vpop.f32.mrf.mxu0
    %v237 = vadd.f32 %v102, %v236
    %238 = vmatmul.bf16.gmra.mxu0 %v142
    %v239 = vpop.f32.mrf.mxu0
    %v240 = vadd.f32 %v102, %v239
    %v241 = vpop.f32.mrf.mxu0
    %v242 = vadd.f32 %v102, %v241
    %243 = vmatmul.bf16.gmra.mxu0 %v143
    %v244 = vpop.f32.mrf.mxu0
    %v245 = vadd.f32 %v102, %v244
    %v246 = vpop.f32.mrf.mxu0
    %v247 = vadd.f32 %v102, %v246
    %248 = vdwg.mxu0
    %v249 = vmax.f32 %v210, 0.0
    %v250 = vmax.f32 %v212, 0.0
    %v251 = vmax.f32 %v215, 0.0
    %v252 = vmax.f32 %v217, 0.0
    %v253 = vmax.f32 %v220, 0.0
    %v254 = vmax.f32 %v222, 0.0
    %v255 = vmax.f32 %v225, 0.0
    %v256 = vmax.f32 %v227, 0.0
    %v257 = vmax.f32 %v230, 0.0
    %v258 = vmax.f32 %v232, 0.0
    %v259 = vmax.f32 %v235, 0.0
    %v260 = vmax.f32 %v237, 0.0
    %v261 = vmax.f32 %v240, 0.0
    %v262 = vmax.f32 %v242, 0.0
    %v263 = vmax.f32 %v245, 0.0
    %v264 = vmax.f32 %v247, 0.0
    %v265 = vpack.c.bf16 %v250, %v249
    %v266 = vpack.c.bf16 %v252, %v251
    %v267 = vpack.c.bf16 %v254, %v253
    %v268 = vpack.c.bf16 %v256, %v255
    %v269 = vpack.c.bf16 %v258, %v257
    %v270 = vpack.c.bf16 %v260, %v259
    %v271 = vpack.c.bf16 %v262, %v261
    %v272 = vpack.c.bf16 %v264, %v263
    %v273 = vld [vmem:[#allocation7] sm:$0xf]
    %v274 = vld [vmem:[#allocation7 + $0x4] sm:$0xf]
    %v275 = vld [vmem:[#allocation7 + $0x8] sm:$0xf]
    %v276 = vld [vmem:[#allocation7 + $0xc] sm:$0xf]
    %v277 = vld [vmem:[#allocation7 + $0x10] sm:$0xf]
    %v278 = vld [vmem:[#allocation7 + $0x14] sm:$0xf]
    %v279 = vld [vmem:[#allocation7 + $0x18] sm:$0xf]
    %v280 = vld [vmem:[#allocation7 + $0x1c] sm:$0xf]
    %v281 = vld [vmem:[#allocation7 + $0x20] sm:$0xf]
    %v282 = vld [vmem:[#allocation7 + $0x24] sm:$0xf]
    %v283 = vld [vmem:[#allocation7 + $0x28] sm:$0xf]
    %v284 = vld [vmem:[#allocation7 + $0x2c] sm:$0xf]
    %v285 = vld [vmem:[#allocation7 + $0x30] sm:$0xf]
    %v286 = vld [vmem:[#allocation7 + $0x34] sm:$0xf]
    %v287 = vld [vmem:[#allocation7 + $0x38] sm:$0xf]
    %v288 = vld [vmem:[#allocation7 + $0x3c] sm:$0xf]
    %v289 = vld [vmem:[%s4] sm:$0x1]
    %v291 = vperm.slane %v289, 0
    %v309 = vunpack.c.l.b16 %v273
    %v310 = vunpack.c.l.b16 %v274
    %v311 = vunpack.c.l.b16 %v275
    %v312 = vunpack.c.l.b16 %v276
    %v313 = vunpack.c.l.b16 %v277
    %v314 = vunpack.c.l.b16 %v278
    %v315 = vunpack.c.l.b16 %v279
    %v316 = vunpack.c.l.b16 %v280
    %v317 = vunpack.c.l.b16 %v281
    %v318 = vunpack.c.l.b16 %v282
    %v319 = vunpack.c.l.b16 %v283
    %v320 = vunpack.c.l.b16 %v284
    %v321 = vunpack.c.l.b16 %v285
    %v322 = vunpack.c.l.b16 %v286
    %v323 = vunpack.c.l.b16 %v287
    %v324 = vunpack.c.l.b16 %v288
    %v325 = vpack.c.b16 %v310, %v309
    %v326 = vpack.c.b16 %v312, %v311
    %v327 = vpack.c.b16 %v314, %v313
    %v328 = vpack.c.b16 %v316, %v315
    %v329 = vpack.c.b16 %v318, %v317
    %v330 = vpack.c.b16 %v320, %v319
    %v331 = vpack.c.b16 %v322, %v321
    %v332 = vpack.c.b16 %v324, %v323
    %341 = vmatpush.bf16.msra.mxu0 %v332
    %342 = vmatpush.bf16.msra.mxu0 %v331
    %343 = vmatpush.bf16.msra.mxu0 %v330
    %344 = vmatpush.bf16.msra.mxu0 %v329
    %345 = vmatpush.bf16.msra.mxu0 %v328
    %346 = vmatpush.bf16.msra.mxu0 %v327
    %347 = vmatpush.bf16.msra.mxu0 %v326
    %348 = vmatpush.bf16.msra.mxu0 %v325
    %349 = vmatmul.bf16.gmra.mxu0 %v265
    %v350 = vpop.f32.mrf.mxu0
    %v351 = vadd.f32 %v291, %v350
    %v352 = vpop.f32.mrf.mxu0
    %v353 = vadd.f32 %v291, %v352
    %354 = vmatmul.bf16.gmra.mxu0 %v266
    %v355 = vpop.f32.mrf.mxu0
    %v356 = vadd.f32 %v291, %v355
    %v357 = vpop.f32.mrf.mxu0
    %v358 = vadd.f32 %v291, %v357
    %359 = vmatmul.bf16.gmra.mxu0 %v267
    %v360 = vpop.f32.mrf.mxu0
    %v361 = vadd.f32 %v291, %v360
    %v362 = vpop.f32.mrf.mxu0
    %v363 = vadd.f32 %v291, %v362
    %364 = vmatmul.bf16.gmra.mxu0 %v268
    %v365 = vpop.f32.mrf.mxu0
    %v366 = vadd.f32 %v291, %v365
    %v367 = vpop.f32.mrf.mxu0
    %v368 = vadd.f32 %v291, %v367
    %369 = vmatmul.bf16.gmra.mxu0 %v269
    %v370 = vpop.f32.mrf.mxu0
    %v371 = vadd.f32 %v291, %v370
    %v372 = vpop.f32.mrf.mxu0
    %v373 = vadd.f32 %v291, %v372
    %374 = vmatmul.bf16.gmra.mxu0 %v270
    %v375 = vpop.f32.mrf.mxu0
    %v376 = vadd.f32 %v291, %v375
    %v377 = vpop.f32.mrf.mxu0
    %v378 = vadd.f32 %v291, %v377
    %379 = vmatmul.bf16.gmra.mxu0 %v271
    %v380 = vpop.f32.mrf.mxu0
    %v381 = vadd.f32 %v291, %v380
    %v382 = vpop.f32.mrf.mxu0
    %v383 = vadd.f32 %v291, %v382
    %384 = vmatmul.bf16.gmra.mxu0 %v272
    %v385 = vpop.f32.mrf.mxu0
    %v386 = vadd.f32 %v291, %v385
    %v387 = vpop.f32.mrf.mxu0
    %v388 = vadd.f32 %v291, %v387
    %389 = vdwg.mxu0
    %v390 = vlaneseq
    %v391 = vand.u32 %v390, 127
    %vm392 = vcmp.lt.s32.totalorder %v391, 64
    %v393 = vsel %vm392, %v351, -inf
    %v394 = vsel %vm392, %v353, -inf
    %v395 = vsel %vm392, %v356, -inf
    %v396 = vsel %vm392, %v358, -inf
    %v397 = vsel %vm392, %v361, -inf
    %v398 = vsel %vm392, %v363, -inf
    %v399 = vsel %vm392, %v366, -inf
    %v400 = vsel %vm392, %v368, -inf
    %v401 = vsel %vm392, %v371, -inf
    %v402 = vsel %vm392, %v373, -inf
    %v403 = vsel %vm392, %v376, -inf
    %v404 = vsel %vm392, %v378, -inf
    %v405 = vsel %vm392, %v381, -inf
    %v406 = vsel %vm392, %v383, -inf
    %v407 = vsel %vm392, %v386, -inf
    %v408 = vsel %vm392, %v388, -inf
    %409 = vmax.xlane.f32.xlu0 %v393
    %v410 = vpop.xlane.xlu0 %409
    %411 = vmax.xlane.f32.xlu0 %v394
    %v412 = vpop.xlane.xlu0 %411
    %413 = vmax.xlane.f32.xlu0 %v395
    %v414 = vpop.xlane.xlu0 %413
    %415 = vmax.xlane.f32.xlu0 %v396
    %v416 = vpop.xlane.xlu0 %415
    %417 = vmax.xlane.f32.xlu0 %v397
    %v418 = vpop.xlane.xlu0 %417
    %419 = vmax.xlane.f32.xlu0 %v398
    %v420 = vpop.xlane.xlu0 %419
    %421 = vmax.xlane.f32.xlu0 %v399
    %v422 = vpop.xlane.xlu0 %421
    %423 = vmax.xlane.f32.xlu0 %v400
    %v424 = vpop.xlane.xlu0 %423
    %425 = vmax.xlane.f32.xlu0 %v401
    %v426 = vpop.xlane.xlu0 %425
    %427 = vmax.xlane.f32.xlu0 %v402
    %v428 = vpop.xlane.xlu0 %427
    %429 = vmax.xlane.f32.xlu0 %v403
    %v430 = vpop.xlane.xlu0 %429
    %431 = vmax.xlane.f32.xlu0 %v404
    %v432 = vpop.xlane.xlu0 %431
    %433 = vmax.xlane.f32.xlu0 %v405
    %v434 = vpop.xlane.xlu0 %433
    %435 = vmax.xlane.f32.xlu0 %v406
    %v436 = vpop.xlane.xlu0 %435
    %437 = vmax.xlane.f32.xlu0 %v407
    %v438 = vpop.xlane.xlu0 %437
    %439 = vmax.xlane.f32.xlu0 %v408
    %v440 = vpop.xlane.xlu0 %439
    %v441 = vsub.f32 %v393, %v410
    %v442 = vsub.f32 %v394, %v412
    %v443 = vsub.f32 %v395, %v414
    %v444 = vsub.f32 %v396, %v416
    %v445 = vsub.f32 %v397, %v418
    %v446 = vsub.f32 %v398, %v420
    %v447 = vsub.f32 %v399, %v422
    %v448 = vsub.f32 %v400, %v424
    %v449 = vsub.f32 %v401, %v426
    %v450 = vsub.f32 %v402, %v428
    %v451 = vsub.f32 %v403, %v430
    %v452 = vsub.f32 %v404, %v432
    %v453 = vsub.f32 %v405, %v434
    %v454 = vsub.f32 %v406, %v436
    %v455 = vsub.f32 %v407, %v438
    %v456 = vsub.f32 %v408, %v440
    %v457 = vmul.f32 %v441, 1.442695
    %v458 = vpow.pop %v457
    %v459 = vmul.f32 %v442, 1.442695
    %v460 = vpow.pop %v459
    %v461 = vmul.f32 %v443, 1.442695
    %v462 = vpow.pop %v461
    %v463 = vmul.f32 %v444, 1.442695
    %v464 = vpow.pop %v463
    %v465 = vmul.f32 %v445, 1.442695
    %v466 = vpow.pop %v465
    %v467 = vmul.f32 %v446, 1.442695
    %v468 = vpow.pop %v467
    %v469 = vmul.f32 %v447, 1.442695
    %v470 = vpow.pop %v469
    %v471 = vmul.f32 %v448, 1.442695
    %v472 = vpow.pop %v471
    %v473 = vmul.f32 %v449, 1.442695
    %v474 = vpow.pop %v473
    %v475 = vmul.f32 %v450, 1.442695
    %v476 = vpow.pop %v475
    %v477 = vmul.f32 %v451, 1.442695
    %v478 = vpow.pop %v477
    %v479 = vmul.f32 %v452, 1.442695
    %v480 = vpow.pop %v479
    %v481 = vmul.f32 %v453, 1.442695
    %v482 = vpow.pop %v481
    %v483 = vmul.f32 %v454, 1.442695
    %v484 = vpow.pop %v483
    %v485 = vmul.f32 %v455, 1.442695
    %v486 = vpow.pop %v485
    %v487 = vmul.f32 %v456, 1.442695
    %v488 = vpow.pop %v487
    %489 = vadd.xlane.f32.xlu0 %v458
    %v490 = vpop.xlane.xlu0 %489
    %491 = vadd.xlane.f32.xlu0 %v460
    %v492 = vpop.xlane.xlu0 %491
    %493 = vadd.xlane.f32.xlu0 %v462
    %v494 = vpop.xlane.xlu0 %493
    %495 = vadd.xlane.f32.xlu0 %v464
    %v496 = vpop.xlane.xlu0 %495
    %497 = vadd.xlane.f32.xlu0 %v466
    %v498 = vpop.xlane.xlu0 %497
    %499 = vadd.xlane.f32.xlu0 %v468
    %v500 = vpop.xlane.xlu0 %499
    %501 = vadd.xlane.f32.xlu0 %v470
    %v502 = vpop.xlane.xlu0 %501
    %503 = vadd.xlane.f32.xlu0 %v472
    %v504 = vpop.xlane.xlu0 %503
    %505 = vadd.xlane.f32.xlu0 %v474
    %v506 = vpop.xlane.xlu0 %505
    %507 = vadd.xlane.f32.xlu0 %v476
    %v508 = vpop.xlane.xlu0 %507
    %509 = vadd.xlane.f32.xlu0 %v478
    %v510 = vpop.xlane.xlu0 %509
    %511 = vadd.xlane.f32.xlu0 %v480
    %v512 = vpop.xlane.xlu0 %511
    %513 = vadd.xlane.f32.xlu0 %v482
    %v514 = vpop.xlane.xlu0 %513
    %515 = vadd.xlane.f32.xlu0 %v484
    %v516 = vpop.xlane.xlu0 %515
    %517 = vadd.xlane.f32.xlu0 %v486
    %v518 = vpop.xlane.xlu0 %517
    %519 = vadd.xlane.f32.xlu0 %v488
    %v520 = vpop.xlane.xlu0 %519
    %v521 = vlog2.pop %v490
    %v522 = vmul.f32 %v521, 0.6931472
    %v523 = vlog2.pop %v492
    %v524 = vmul.f32 %v523, 0.6931472
    %v525 = vlog2.pop %v494
    %v526 = vmul.f32 %v525, 0.6931472
    %v527 = vlog2.pop %v496
    %v528 = vmul.f32 %v527, 0.6931472
    %v529 = vlog2.pop %v498
    %v530 = vmul.f32 %v529, 0.6931472
    %v531 = vlog2.pop %v500
    %v532 = vmul.f32 %v531, 0.6931472
    %v533 = vlog2.pop %v502
    %v534 = vmul.f32 %v533, 0.6931472
    %v535 = vlog2.pop %v504
    %v536 = vmul.f32 %v535, 0.6931472
    %v537 = vlog2.pop %v506
    %v538 = vmul.f32 %v537, 0.6931472
    %v539 = vlog2.pop %v508
    %v540 = vmul.f32 %v539, 0.6931472
    %v541 = vlog2.pop %v510
    %v542 = vmul.f32 %v541, 0.6931472
    %v543 = vlog2.pop %v512
    %v544 = vmul.f32 %v543, 0.6931472
    %v545 = vlog2.pop %v514
    %v546 = vmul.f32 %v545, 0.6931472
    %v547 = vlog2.pop %v516
    %v548 = vmul.f32 %v547, 0.6931472
    %v549 = vlog2.pop %v518
    %v550 = vmul.f32 %v549, 0.6931472
    %v551 = vlog2.pop %v520
    %v552 = vmul.f32 %v551, 0.6931472
    %v553 = vsub.f32 %v441, %v522
    %v554 = vsub.f32 %v442, %v524
    %v555 = vsub.f32 %v443, %v526
    %v556 = vsub.f32 %v444, %v528
    %v557 = vsub.f32 %v445, %v530
    %v558 = vsub.f32 %v446, %v532
    %v559 = vsub.f32 %v447, %v534
    %v560 = vsub.f32 %v448, %v536
    %v561 = vsub.f32 %v449, %v538
    %v562 = vsub.f32 %v450, %v540
    %v563 = vsub.f32 %v451, %v542
    %v564 = vsub.f32 %v452, %v544
    %v565 = vsub.f32 %v453, %v546
    %v566 = vsub.f32 %v454, %v548
    %v567 = vsub.f32 %v455, %v550
    %v568 = vsub.f32 %v456, %v552
    %569 = vst [vmem:[#allocation8] sm:$0xff] %v553
    %570 = vst [vmem:[#allocation8 + $0x8] sm:$0xff] %v554
    %571 = vst [vmem:[#allocation8 + $0x10] sm:$0xff] %v555
    %572 = vst [vmem:[#allocation8 + $0x18] sm:$0xff] %v556
    %573 = vst [vmem:[#allocation8 + $0x20] sm:$0xff] %v557
    %574 = vst [vmem:[#allocation8 + $0x28] sm:$0xff] %v558
    %575 = vst [vmem:[#allocation8 + $0x30] sm:$0xff] %v559
    %576 = vst [vmem:[#allocation8 + $0x38] sm:$0xff] %v560
    %577 = vst [vmem:[#allocation8 + $0x40] sm:$0xff] %v561
    %578 = vst [vmem:[#allocation8 + $0x48] sm:$0xff] %v562
    %579 = vst [vmem:[#allocation8 + $0x50] sm:$0xff] %v563
    %580 = vst [vmem:[#allocation8 + $0x58] sm:$0xff] %v564
    %581 = vst [vmem:[#allocation8 + $0x60] sm:$0xff] %v565
    %582 = vst [vmem:[#allocation8 + $0x68] sm:$0xff] %v566
    %583 = vst [vmem:[#allocation8 + $0x70] sm:$0xff] %v567
    %584 = vst [vmem:[#allocation8 + $0x78] sm:$0xff] %v568
    // Predicated region
    $region34: #{tpu_custom_call.1} parent=1 // pred_check
      _
    $region35: #{tpu_custom_call.1} parent=1 // pred_check_branch
      %586 = sbr.rel (0) target = $region37
    $region36: #{tpu_custom_call.1} parent=1 // pred_region
      %588 = vsyncadd [#allocation4], 0
      %s589 = sshll.u32 [#allocation8], 4
      %s590 = int_to_ptr.vmem [resolvable:$true] %s589
      %s591 = sshll.u32 %s5, 4
      %s592 = int_to_ptr.hbm [resolvable:$true] %s591
      %597 = dma.vmem_to_hbm [thread:$0]  %s590, 2048, %s592, [#allocation4], 128, 128, 8
    $region37: #{tpu_custom_call.1} parent=1 // pred_fallthru
      _
    // Predicated region
    $region38: #{tpu_custom_call.1} parent=1 // pred_check
      _
    $region39: #{tpu_custom_call.1} parent=1 // pred_check_branch
      %599 = sbr.rel (0) target = $region41
    $region40: #{tpu_custom_call.1} parent=1 // pred_region
      %601 = dma.done [#allocation4], 2048
    $region41: #{tpu_custom_call.1} parent=1 // pred_fallthru
      _
    %602 = vsyncpa [#allocation3], 1
    %603 = vsyncpa [#allocation6], 1
    %604 = vsyncpa [#allocation4], 1

</llo_original>
